<compile_context>
chip_gen: v5e
topology: v5e:2x2
jax: 0.10.0
libtpu: 0.0.40
codegen_flags: <defaults>
</compile_context>

<pallas_src>
import functools

import jax
import jax.numpy as jnp
from jax.experimental import pallas as pl
from jax.experimental.pallas import tpu as pltpu

FEATURES = 50
LANE = 128      # pad feature dim to a lane-dense 128
SUBLANE = 8     # pad batch dim to a multiple of 8


def _round_up(n, m):
    return ((n + m - 1) // m) * m


def nw_kernel(x_ref, w_ref, b_ref, o_ref, *, n_layers):
    """Entire network in one invocation (no grid).

    x_ref: (Bp, Fp)    activations, resident in VMEM
    w_ref: (L, Fp, Fp) weights in x @ W layout, resident in VMEM
    b_ref: (L, 1, Fp)  biases
    o_ref: (Bp, Fp)    output
    """
    act = x_ref[...]
    # Static Python unroll: each w_ref[l] / b_ref[l] is a static ref view,
    # no dynamic-slice scalar work; L is small so vreg pressure stays bounded.
    for l in range(n_layers):
        y = jnp.dot(act, w_ref[l], preferred_element_type=jnp.float32)
        act = jnp.maximum(y + b_ref[l], 0.0)   # (1, Fp) bias broadcasts over rows
    o_ref[...] = act.astype(o_ref.dtype)


def prepare_params(w_torch, b):
    """One-time (model-init) weight prep, hoisted out of the hot path.

    w_torch: (L, F_out, F_in) as stored by torch.nn.Linear; b: (L, F_out).
    Returns padded, pre-transposed (L, Fp, Fp) weights and (L, 1, Fp) biases.
    """
    n_layers, f_out, f_in = w_torch.shape
    fp = _round_up(max(f_out, f_in, LANE), LANE)
    # PyTorch Linear computes x @ W.T + b; pre-transpose once to (L, in, out).
    w = jnp.transpose(w_torch, (0, 2, 1)).astype(jnp.float32)
    w_p = jnp.pad(w, ((0, 0), (0, fp - f_in), (0, fp - f_out)))
    b_p = jnp.pad(b.astype(jnp.float32), ((0, 0), (0, fp - f_out)))[:, None, :]
    return jax.device_put(w_p), jax.device_put(b_p)


@jax.jit
def nw_forward(x, w_p, b_p):
    """x: (B, F) f32; w_p: (L, Fp, Fp) pre-padded/transposed; b_p: (L, 1, Fp).
    Returns relu(... relu(x @ W0.T + b0) ...) of shape (B, F)."""
    batch, feat = x.shape
    n_layers, fp, _ = w_p.shape
    bp = _round_up(max(batch, SUBLANE), SUBLANE)

    # Only remaining per-call prep: one pad HLO on the activation.
    x_p = jnp.pad(x.astype(jnp.float32), ((0, bp - batch), (0, fp - feat)))

    out_p = pl.pallas_call(
        functools.partial(nw_kernel, n_layers=n_layers),
        out_shape=jax.ShapeDtypeStruct((bp, fp), jnp.float32),
        # No grid: single invocation, full arrays single-buffered in VMEM.
        in_specs=[
            pl.BlockSpec(memory_space=pltpu.MemorySpace.VMEM),
            pl.BlockSpec(memory_space=pltpu.MemorySpace.VMEM),
            pl.BlockSpec(memory_space=pltpu.MemorySpace.VMEM),
        ],
        out_specs=pl.BlockSpec(memory_space=pltpu.MemorySpace.VMEM),
    )(x_p, w_p, b_p)

    return out_p[:batch, :feat]


def reference_forward(x, w_torch, b):
    """Plain-JAX reference mirroring the PyTorch NW module."""
    for l in range(w_torch.shape[0]):
        x = jnp.maximum(x @ w_torch[l].T + b[l], 0.0)
    return x


if __name__ == "__main__":
    n_layers = 3
    batch = 8

    key = jax.random.PRNGKey(0)
    kx, kw, kb = jax.random.split(key, 3)

    # Deterministic PyTorch-style Linear init: U(-1/sqrt(fan_in), 1/sqrt(fan_in)).
    bound = 1.0 / jnp.sqrt(jnp.float32(FEATURES))
    x = jax.random.normal(kx, (batch, FEATURES), jnp.float32)
    w_torch = jax.random.uniform(
        kw, (n_layers, FEATURES, FEATURES), jnp.float32, -bound, bound
    )
    b = jax.random.uniform(kb, (n_layers, FEATURES), jnp.float32, -bound, bound)

    # One-time param prep (hoisted out of the per-call path).
    w_p, b_p = prepare_params(w_torch, b)

    out = jax.block_until_ready(nw_forward(x, w_p, b_p))
    ref = reference_forward(x, w_torch, b)

    assert out.shape == (batch, FEATURES)
    assert jnp.allclose(out, ref, atol=1e-5, rtol=1e-5), "mismatch vs reference"

    print("KERNEL_OK")
</pallas_src>

<mosaic_0001>
module attributes {stable_mosaic.version = 11 : i64} {
  func.func @nw_kernel(%arg0: memref<8x128xf32, #tpu.memory_space<vmem>>, %arg1: memref<3x128x128xf32, #tpu.memory_space<vmem>>, %arg2: memref<3x1x128xf32, #tpu.memory_space<vmem>>, %arg3: memref<8x128xf32, #tpu.memory_space<vmem>>) attributes {dimension_semantics = [], scalar_prefetch = 0 : i64, scratch_operands = 0 : i64, tpu.core_type = #tpu.core_type<tc>} {
    %c0 = arith.constant 0 : index
    %c0_0 = arith.constant 0 : index
    %0 = vector.load %arg0[%c0, %c0_0] : memref<8x128xf32, #tpu.memory_space<vmem>>, vector<8x128xf32>
    %c0_1 = arith.constant 0 : index
    %c0_2 = arith.constant 0 : index
    %c0_3 = arith.constant 0 : index
    %1 = vector.load %arg1[%c0_1, %c0_2, %c0_3] : memref<3x128x128xf32, #tpu.memory_space<vmem>>, vector<1x128x128xf32>
    %2 = vector.shape_cast %1 : vector<1x128x128xf32> to vector<128x128xf32>
    %cst = arith.constant dense<0.000000e+00> : vector<8x128xf32>
    %3 = tpu.matmul %0, %2, %cst {dimension_numbers = #tpu.dot_dimension_numbers<[1], [0], [0], [1], [0, 0, 1, 1], [], []>} : vector<8x128xf32>, vector<128x128xf32>, vector<8x128xf32> -> vector<8x128xf32>
    %c0_4 = arith.constant 0 : index
    %c0_5 = arith.constant 0 : index
    %c0_6 = arith.constant 0 : index
    %4 = vector.load %arg2[%c0_4, %c0_5, %c0_6] : memref<3x1x128xf32, #tpu.memory_space<vmem>>, vector<1x1x128xf32>
    %5 = vector.shape_cast %4 : vector<1x1x128xf32> to vector<1x128xf32>
    %6 = vector.broadcast %5 : vector<1x128xf32> to vector<8x128xf32>
    %7 = arith.addf %3, %6 : vector<8x128xf32>
    %cst_7 = arith.constant 0.000000e+00 : f32
    %8 = vector.broadcast %cst_7 : f32 to vector<8x128xf32>
    %9 = arith.maximumf %7, %8 : vector<8x128xf32>
    %c1 = arith.constant 1 : index
    %c0_8 = arith.constant 0 : index
    %c0_9 = arith.constant 0 : index
    %10 = vector.load %arg1[%c1, %c0_8, %c0_9] : memref<3x128x128xf32, #tpu.memory_space<vmem>>, vector<1x128x128xf32>
    %11 = vector.shape_cast %10 : vector<1x128x128xf32> to vector<128x128xf32>
    %cst_10 = arith.constant dense<0.000000e+00> : vector<8x128xf32>
    %12 = tpu.matmul %9, %11, %cst_10 {dimension_numbers = #tpu.dot_dimension_numbers<[1], [0], [0], [1], [0, 0, 1, 1], [], []>} : vector<8x128xf32>, vector<128x128xf32>, vector<8x128xf32> -> vector<8x128xf32>
    %c1_11 = arith.constant 1 : index
    %c0_12 = arith.constant 0 : index
    %c0_13 = arith.constant 0 : index
    %13 = vector.load %arg2[%c1_11, %c0_12, %c0_13] : memref<3x1x128xf32, #tpu.memory_space<vmem>>, vector<1x1x128xf32>
    %14 = vector.shape_cast %13 : vector<1x1x128xf32> to vector<1x128xf32>
    %15 = vector.broadcast %14 : vector<1x128xf32> to vector<8x128xf32>
    %16 = arith.addf %12, %15 : vector<8x128xf32>
    %cst_14 = arith.constant 0.000000e+00 : f32
    %17 = vector.broadcast %cst_14 : f32 to vector<8x128xf32>
    %18 = arith.maximumf %16, %17 : vector<8x128xf32>
    %c2 = arith.constant 2 : index
    %c0_15 = arith.constant 0 : index
    %c0_16 = arith.constant 0 : index
    %19 = vector.load %arg1[%c2, %c0_15, %c0_16] : memref<3x128x128xf32, #tpu.memory_space<vmem>>, vector<1x128x128xf32>
    %20 = vector.shape_cast %19 : vector<1x128x128xf32> to vector<128x128xf32>
    %cst_17 = arith.constant dense<0.000000e+00> : vector<8x128xf32>
    %21 = tpu.matmul %18, %20, %cst_17 {dimension_numbers = #tpu.dot_dimension_numbers<[1], [0], [0], [1], [0, 0, 1, 1], [], []>} : vector<8x128xf32>, vector<128x128xf32>, vector<8x128xf32> -> vector<8x128xf32>
    %c2_18 = arith.constant 2 : index
    %c0_19 = arith.constant 0 : index
    %c0_20 = arith.constant 0 : index
    %22 = vector.load %arg2[%c2_18, %c0_19, %c0_20] : memref<3x1x128xf32, #tpu.memory_space<vmem>>, vector<1x1x128xf32>
    %23 = vector.shape_cast %22 : vector<1x1x128xf32> to vector<1x128xf32>
    %24 = vector.broadcast %23 : vector<1x128xf32> to vector<8x128xf32>
    %25 = arith.addf %21, %24 : vector<8x128xf32>
    %cst_21 = arith.constant 0.000000e+00 : f32
    %26 = vector.broadcast %cst_21 : f32 to vector<8x128xf32>
    %27 = arith.maximumf %25, %26 : vector<8x128xf32>
    %c0_22 = arith.constant 0 : index
    %c0_23 = arith.constant 0 : index
    %28 = vector.load %arg3[%c0_22, %c0_23] : memref<8x128xf32, #tpu.memory_space<vmem>>, vector<8x128xf32>
    tpu.vector_store %arg3[%c0_22, %c0_23], %27 {strides = array<i32>} : memref<8x128xf32, #tpu.memory_space<vmem>>, vector<8x128xf32>,
    return
  }
}

</mosaic_0001>

<llo_original>
// kernel: nw_forward.1
$region0: #{nw_forward.1}
  #allocation0 [shape = 'u32[]', space=smem, size = 0x4, offset = 0x4, fixed_abs, tag = 'smem constant byte address 0x4 - core index']
  #allocation1 [shape = 'u32[72,128]{1,0:T(1,128)}', space=vmem, size = 0x9000, scoped, tag = 'internal scratch']
  %s0 = inlined_call_operand.vmem [shape: f32[8,128], index: 0, kind: input, shape index: {}]
  %s1 = inlined_call_operand.hbm [shape: f32[3,128,128], index: 1, kind: input, shape index: {}]
  %s2 = inlined_call_operand.vmem [shape: f32[3,1,128], index: 2, kind: input, shape index: {}]
  %s3 = inlined_call_operand.hbm [shape: f32[8,128], index: 3, kind: output, shape index: {}]
  %s4 = sld [smem:[#allocation0]]
  $region26: #{nw_forward.1} parent=0
    _
  %s6 = ssub.s32 1, %s4
  %s7 = scalar_select 0, %s6, %s4
  $region1: #{nw_forward.1} parent=0
    #allocation2 [shape = 'u8[196608]{0}', space=vmem, size = 0x30000, scoped, tag = 'input window, operand 1, single buffered']
    #allocation3 [shape = 's32[1]{0}', space=sflag, size = 0x4, scoped, tag = 'scoped memory for nw_forward.1']
    #allocation4 [shape = 's32[1]{0}', space=sflag, size = 0x4, scoped, tag = 'scoped memory for nw_forward.1']
    #allocation5 [shape = 'u8[4096]{0}', space=vmem, size = 0x1000, scoped, tag = 'output window, operand 0, single buffered']
    %8 = vsyncpa [#allocation3], 0
    %9 = vsyncpa [#allocation4], 0
    // Predicated region
    $region2: #{nw_forward.1} parent=1 // pred_check
      _
    $region3: #{nw_forward.1} parent=1 // pred_check_branch
      %11 = sbr.rel (0) target = $region5
    $region4: #{nw_forward.1} parent=1 // pred_region
      _
    $region5: #{nw_forward.1} parent=1 // pred_fallthru
      _
    // Predicated region
    $region6: #{nw_forward.1} parent=1 // pred_check
      _
    $region7: #{nw_forward.1} parent=1 // pred_check_branch
      %13 = sbr.rel (0) target = $region9
    $region8: #{nw_forward.1} parent=1 // pred_region
      %15 = vsyncadd [#allocation3], 0
      %s16 = sshll.u32 %s1, 4
      %s17 = int_to_ptr.hbm [resolvable:$true] %s16
      %s18 = sshll.u32 [#allocation2], 4
      %s19 = int_to_ptr.vmem [resolvable:$true] %s18
      %24 = dma.hbm_to_vmem [thread:$0]  %s17, 6144, %s19, [#allocation3], 128, 128, 8
    $region9: #{nw_forward.1} parent=1 // pred_fallthru
      _
    // Predicated region
    $region10: #{nw_forward.1} parent=1 // pred_check
      _
    $region11: #{nw_forward.1} parent=1 // pred_check_branch
      %26 = sbr.rel (0) target = $region13
    $region12: #{nw_forward.1} parent=1 // pred_region
      _
    $region13: #{nw_forward.1} parent=1 // pred_fallthru
      _
    // Predicated region
    $region14: #{nw_forward.1} parent=1 // pred_check
      _
    $region15: #{nw_forward.1} parent=1 // pred_check_branch
      %28 = sbr.rel (0) target = $region17
    $region16: #{nw_forward.1} parent=1 // pred_region
      %30 = dma.done [#allocation3], 6144
    $region17: #{nw_forward.1} parent=1 // pred_fallthru
      _
    %v31 = vld [vmem:[%s0] sm:$0xff]
    %v32 = vld [vmem:[#allocation2] sm:$0xff]
    %v33 = vld [vmem:[#allocation2 + $0x8] sm:$0xff]
    %v34 = vld [vmem:[#allocation2 + $0x10] sm:$0xff]
    %v35 = vld [vmem:[#allocation2 + $0x18] sm:$0xff]
    %v36 = vld [vmem:[#allocation2 + $0x20] sm:$0xff]
    %v37 = vld [vmem:[#allocation2 + $0x28] sm:$0xff]
    %v38 = vld [vmem:[#allocation2 + $0x30] sm:$0xff]
    %v39 = vld [vmem:[#allocation2 + $0x38] sm:$0xff]
    %v40 = vld [vmem:[#allocation2 + $0x40] sm:$0xff]
    %v41 = vld [vmem:[#allocation2 + $0x48] sm:$0xff]
    %v42 = vld [vmem:[#allocation2 + $0x50] sm:$0xff]
    %v43 = vld [vmem:[#allocation2 + $0x58] sm:$0xff]
    %v44 = vld [vmem:[#allocation2 + $0x60] sm:$0xff]
    %v45 = vld [vmem:[#allocation2 + $0x68] sm:$0xff]
    %v46 = vld [vmem:[#allocation2 + $0x70] sm:$0xff]
    %v47 = vld [vmem:[#allocation2 + $0x78] sm:$0xff]
    %v48 = vld [vmem:[%s2] sm:$0x1]
    %v50 = vperm.slane %v48, 0
    %52 = vmatpush.msra.mxu0 %v47
    %53 = vmatpush.msra.mxu0 %v46
    %54 = vmatpush.msra.mxu0 %v45
    %55 = vmatpush.msra.mxu0 %v44
    %56 = vmatpush.msra.mxu0 %v43
    %57 = vmatpush.msra.mxu0 %v42
    %58 = vmatpush.msra.mxu0 %v41
    %59 = vmatpush.msra.mxu0 %v40
    %60 = vmatpush.msra.mxu0 %v39
    %61 = vmatpush.msra.mxu0 %v38
    %62 = vmatpush.msra.mxu0 %v37
    %63 = vmatpush.msra.mxu0 %v36
    %64 = vmatpush.msra.mxu0 %v35
    %65 = vmatpush.msra.mxu0 %v34
    %66 = vmatpush.msra.mxu0 %v33
    %67 = vmatpush.msra.mxu0 %v32
    %68 = vmatmul.f32.gmra.mxu0 %v31
    %v69 = vpop.f32.mrf.mxu0
    %v70 = vadd.f32 %v50, %v69
    %71 = vdwg.mxu0
    %v72 = vmax.f32 %v70, 0.0
    %s73 = scalar_lea.vmem [#allocation2], 128
    %v74 = vld [vmem:[%s73] sm:$0xff]
    %v75 = vld [vmem:[%s73 + $0x8] sm:$0xff]
    %v76 = vld [vmem:[%s73 + $0x10] sm:$0xff]
    %v77 = vld [vmem:[%s73 + $0x18] sm:$0xff]
    %v78 = vld [vmem:[%s73 + $0x20] sm:$0xff]
    %v79 = vld [vmem:[%s73 + $0x28] sm:$0xff]
    %v80 = vld [vmem:[%s73 + $0x30] sm:$0xff]
    %v81 = vld [vmem:[%s73 + $0x38] sm:$0xff]
    %v82 = vld [vmem:[%s73 + $0x40] sm:$0xff]
    %v83 = vld [vmem:[%s73 + $0x48] sm:$0xff]
    %v84 = vld [vmem:[%s73 + $0x50] sm:$0xff]
    %v85 = vld [vmem:[%s73 + $0x58] sm:$0xff]
    %v86 = vld [vmem:[%s73 + $0x60] sm:$0xff]
    %v87 = vld [vmem:[%s73 + $0x68] sm:$0xff]
    %v88 = vld [vmem:[%s73 + $0x70] sm:$0xff]
    %v89 = vld [vmem:[%s73 + $0x78] sm:$0xff]
    %s90 = scalar_lea.vmem %s2, 1
    %v91 = vld [vmem:[%s90] sm:$0x1]
    %v93 = vperm.slane %v91, 0
    %95 = vmatpush.msra.mxu0 %v89
    %96 = vmatpush.msra.mxu0 %v88
    %97 = vmatpush.msra.mxu0 %v87
    %98 = vmatpush.msra.mxu0 %v86
    %99 = vmatpush.msra.mxu0 %v85
    %100 = vmatpush.msra.mxu0 %v84
    %101 = vmatpush.msra.mxu0 %v83
    %102 = vmatpush.msra.mxu0 %v82
    %103 = vmatpush.msra.mxu0 %v81
    %104 = vmatpush.msra.mxu0 %v80
    %105 = vmatpush.msra.mxu0 %v79
    %106 = vmatpush.msra.mxu0 %v78
    %107 = vmatpush.msra.mxu0 %v77
    %108 = vmatpush.msra.mxu0 %v76
    %109 = vmatpush.msra.mxu0 %v75
    %110 = vmatpush.msra.mxu0 %v74
    %111 = vmatmul.f32.gmra.mxu0 %v72
    %v112 = vpop.f32.mrf.mxu0
    %v113 = vadd.f32 %v93, %v112
    %114 = vdwg.mxu0
    %v115 = vmax.f32 %v113, 0.0
    %s116 = scalar_lea.vmem [#allocation2], 256
    %v117 = vld [vmem:[%s116] sm:$0xff]
    %v118 = vld [vmem:[%s116 + $0x8] sm:$0xff]
    %v119 = vld [vmem:[%s116 + $0x10] sm:$0xff]
    %v120 = vld [vmem:[%s116 + $0x18] sm:$0xff]
    %v121 = vld [vmem:[%s116 + $0x20] sm:$0xff]
    %v122 = vld [vmem:[%s116 + $0x28] sm:$0xff]
    %v123 = vld [vmem:[%s116 + $0x30] sm:$0xff]
    %v124 = vld [vmem:[%s116 + $0x38] sm:$0xff]
    %v125 = vld [vmem:[%s116 + $0x40] sm:$0xff]
    %v126 = vld [vmem:[%s116 + $0x48] sm:$0xff]
    %v127 = vld [vmem:[%s116 + $0x50] sm:$0xff]
    %v128 = vld [vmem:[%s116 + $0x58] sm:$0xff]
    %v129 = vld [vmem:[%s116 + $0x60] sm:$0xff]
    %v130 = vld [vmem:[%s116 + $0x68] sm:$0xff]
    %v131 = vld [vmem:[%s116 + $0x70] sm:$0xff]
    %v132 = vld [vmem:[%s116 + $0x78] sm:$0xff]
    %s133 = scalar_lea.vmem %s2, 2
    %v134 = vld [vmem:[%s133] sm:$0x1]
    %v136 = vperm.slane %v134, 0
    %138 = vmatpush.msra.mxu0 %v132
    %139 = vmatpush.msra.mxu0 %v131
    %140 = vmatpush.msra.mxu0 %v130
    %141 = vmatpush.msra.mxu0 %v129
    %142 = vmatpush.msra.mxu0 %v128
    %143 = vmatpush.msra.mxu0 %v127
    %144 = vmatpush.msra.mxu0 %v126
    %145 = vmatpush.msra.mxu0 %v125
    %146 = vmatpush.msra.mxu0 %v124
    %147 = vmatpush.msra.mxu0 %v123
    %148 = vmatpush.msra.mxu0 %v122
    %149 = vmatpush.msra.mxu0 %v121
    %150 = vmatpush.msra.mxu0 %v120
    %151 = vmatpush.msra.mxu0 %v119
    %152 = vmatpush.msra.mxu0 %v118
    %153 = vmatpush.msra.mxu0 %v117
    %154 = vmatmul.f32.gmra.mxu0 %v115
    %v155 = vpop.f32.mrf.mxu0
    %v156 = vadd.f32 %v136, %v155
    %157 = vdwg.mxu0
    %v158 = vmax.f32 %v156, 0.0
    %159 = vst [vmem:[#allocation5] sm:$0xff] %v158
    // Predicated region
    $region18: #{nw_forward.1} parent=1 // pred_check
      _
    $region19: #{nw_forward.1} parent=1 // pred_check_branch
      %161 = sbr.rel (0) target = $region21
    $region20: #{nw_forward.1} parent=1 // pred_region
      %163 = vsyncadd [#allocation4], 0
      %s165 = sshll.u32 [#allocation5], 4
      %s166 = int_to_ptr.vmem [resolvable:$true] %s165
      %s167 = sshll.u32 %s3, 4
      %s168 = int_to_ptr.hbm [resolvable:$true] %s167
      %170 = dma.vmem_to_hbm [thread:$0]  %s166, 128, %s168, [#allocation4]
    $region21: #{nw_forward.1} parent=1 // pred_fallthru
      _
    // Predicated region
    $region22: #{nw_forward.1} parent=1 // pred_check
      _
    $region23: #{nw_forward.1} parent=1 // pred_check_branch
      %172 = sbr.rel (0) target = $region25
    $region24: #{nw_forward.1} parent=1 // pred_region
      %174 = dma.done [#allocation4], 128
    $region25: #{nw_forward.1} parent=1 // pred_fallthru
      _
    %175 = vsyncpa [#allocation3], 1
    %176 = vsyncpa [#allocation4], 1

</llo_original>
